<compile_context>
chip_gen: v6e
topology: v6e:2x2x1
jax: 0.10.0
libtpu: 0.0.40
codegen_flags: <defaults>
</compile_context>

<pallas_src>
import jax
import jax.numpy as jnp
from jax.experimental import pallas as pl
from jax.experimental.pallas import tpu as pltpu

N_EMBD = 200
HIDDEN = 4 * N_EMBD  # 800


def _round_up(v, m):
    return (v + m - 1) // m * m


def _ffn_kernel(x_ref, w1_ref, b1_ref, w2_ref, b2_ref, o_ref):
    # x_ref : (bm, C)  f32     w1_ref: (C, Hp)  bf16    b1_ref: (1, Hp) f32
    # w2_ref: (Hp, C)  bf16    b2_ref: (1, C)   f32     o_ref : (bm, C) f32
    x = x_ref[...].astype(jnp.bfloat16)                                   # VPU cast
    h = jnp.dot(x, w1_ref[...], preferred_element_type=jnp.float32) + b1_ref[...]
    h = jnp.maximum(h, 0.0).astype(jnp.bfloat16)                          # ReLU, bf16 for 2nd MXU pass
    out = jnp.dot(h, w2_ref[...], preferred_element_type=jnp.float32) + b2_ref[...]
    o_ref[...] = out.astype(o_ref.dtype)
    # Dropout(p=0.0) -> identity, intentionally omitted.


def prepare_ffn_params(w1, b1, w2, b2):
    """One-time pad (hidden 800->1024) and bf16 cast of the weights. Reuse across calls."""
    C, H = w1.shape
    Hp = _round_up(H, 128)
    bf16, f32 = jnp.bfloat16, jnp.float32
    w1_p = jnp.zeros((C, Hp), bf16).at[:, :H].set(w1.astype(bf16))
    b1_p = jnp.zeros((1, Hp), f32).at[0, :H].set(b1.astype(f32))
    w2_p = jnp.zeros((Hp, C), bf16).at[:H, :].set(w2.astype(bf16))
    b2_p = b2.astype(f32).reshape(1, C)
    return w1_p, b1_p, w2_p, b2_p


def feedforward(x, params, *, block_m=1024):
    """x: (B, T, C) float32.  params: output of prepare_ffn_params.  Returns (B, T, C) f32."""
    w1_p, b1_p, w2_p, b2_p = params
    B, T, C = x.shape
    Hp = w1_p.shape[1]
    M = B * T
    x2d = x.reshape(M, C)                      # free (collapses leading dims)

    # 16-aligned M tile; cap at ~M/2 so large batches split across v7x's two TCs.
    bm = max(16, min(_round_up(block_m, 16), _round_up(pl.cdiv(M, 2), 16)))
    grid = (pl.cdiv(M, bm),)

    flops = 2 * M * (C * Hp + Hp * C)
    bytes_accessed = (x2d.size * 4 + w1_p.size * 2 + w2_p.size * 2
                      + b1_p.size * 4 + b2_p.size * 4 + M * C * 4)

    out2d = pl.pallas_call(
        _ffn_kernel,
        out_shape=jax.ShapeDtypeStruct((M, C), jnp.float32),
        grid=grid,
        in_specs=[
            pl.BlockSpec((bm, C), lambda i: (i, 0)),    # x tile marches over M (unpadded)
            pl.BlockSpec((C, Hp), lambda i: (0, 0)),    # w1 resident across grid
            pl.BlockSpec((1, Hp), lambda i: (0, 0)),    # b1 resident
            pl.BlockSpec((Hp, C), lambda i: (0, 0)),    # w2 resident
            pl.BlockSpec((1, C),  lambda i: (0, 0)),    # b2 resident
        ],
        out_specs=pl.BlockSpec((bm, C), lambda i: (i, 0)),
        compiler_params=pltpu.CompilerParams(
            dimension_semantics=("parallel",),          # shards M across TCs on v7x
        ),
        cost_estimate=pl.CostEstimate(
            flops=flops, transcendentals=0, bytes_accessed=bytes_accessed),
    )(x2d, w1_p, b1_p, w2_p, b2_p)

    return out2d.reshape(B, T, C)


def init_params(key, n_embd=N_EMBD):
    """Deterministic init mirroring nn.Linear's U(-1/sqrt(fan_in), 1/sqrt(fan_in))."""
    k1, k2, k3, k4 = jax.random.split(key, 4)
    hidden = 4 * n_embd
    lim1 = 1.0 / jnp.sqrt(jnp.float32(n_embd))
    lim2 = 1.0 / jnp.sqrt(jnp.float32(hidden))
    # Stored as (in, out) so kernel does x @ W (PyTorch stores (out, in) and does x @ W.T).
    w1 = jax.random.uniform(k1, (n_embd, hidden), jnp.float32, -lim1, lim1)
    b1 = jax.random.uniform(k2, (hidden,), jnp.float32, -lim1, lim1)
    w2 = jax.random.uniform(k3, (hidden, n_embd), jnp.float32, -lim2, lim2)
    b2 = jax.random.uniform(k4, (n_embd,), jnp.float32, -lim2, lim2)
    return w1, b1, w2, b2


if __name__ == "__main__":
    key = jax.random.PRNGKey(0)
    kx, kp = jax.random.split(key)

    B, T = 2, 8
    x = jax.random.normal(kx, (B, T, N_EMBD), jnp.float32)
    w1, b1, w2, b2 = init_params(kp)
    params = prepare_ffn_params(w1, b1, w2, b2)   # one-time pad + bf16 cast

    out = feedforward(x, params)
    out = jax.block_until_ready(out)
    assert out.shape == (B, T, N_EMBD)

    # Reference 1: same bf16-operand / f32-accumulate numerics (tight tolerance).
    xb = x.reshape(-1, N_EMBD).astype(jnp.bfloat16)
    h_ref = jnp.dot(xb, w1.astype(jnp.bfloat16), preferred_element_type=jnp.float32) + b1
    h_ref = jnp.maximum(h_ref, 0.0).astype(jnp.bfloat16)
    ref_bf = (jnp.dot(h_ref, w2.astype(jnp.bfloat16),
                      preferred_element_type=jnp.float32) + b2).reshape(B, T, N_EMBD)
    assert jnp.allclose(out, ref_bf, atol=1e-3, rtol=1e-3)

    # Reference 2: full-f32 PyTorch-equivalent math (loose tolerance for bf16 operands).
    ref_f32 = jnp.maximum(x @ w1 + b1, 0.0) @ w2 + b2
    assert jnp.allclose(out, ref_f32, atol=5e-2, rtol=5e-2)

    print("KERNEL_OK")
</pallas_src>

<mosaic_0001>
module attributes {stable_mosaic.version = 11 : i64} {
  func.func @_ffn_kernel(%arg0: i32, %arg1: memref<16x200xf32, #tpu.memory_space<vmem>>, %arg2: memref<200x896xbf16, #tpu.memory_space<vmem>>, %arg3: memref<1x896xf32, #tpu.memory_space<vmem>>, %arg4: memref<896x200xbf16, #tpu.memory_space<vmem>>, %arg5: memref<1x200xf32, #tpu.memory_space<vmem>>, %arg6: memref<16x200xf32, #tpu.memory_space<vmem>>) attributes {dimension_semantics = [#tpu.dimension_semantics<parallel>], iteration_bounds = array<i64: 1>, scalar_prefetch = 0 : i64, scratch_operands = 0 : i64, tpu.core_type = #tpu.core_type<tc>, window_params = [{transform_indices = @transform_0, window_bounds = array<i64: 16, 200>}, {pipeline_mode = #tpu.pipeline_mode<synchronous>, transform_indices = @transform_1, window_bounds = array<i64: 200, 896>}, {pipeline_mode = #tpu.pipeline_mode<synchronous>, transform_indices = @transform_2, window_bounds = array<i64: 1, 896>}, {pipeline_mode = #tpu.pipeline_mode<synchronous>, transform_indices = @transform_3, window_bounds = array<i64: 896, 200>}, {pipeline_mode = #tpu.pipeline_mode<synchronous>, transform_indices = @transform_4, window_bounds = array<i64: 1, 200>}, {transform_indices = @transform_5, window_bounds = array<i64: 16, 200>}]} {
    %c0 = arith.constant 0 : index
    %c0_0 = arith.constant 0 : index
    %0 = vector.load %arg1[%c0, %c0_0] : memref<16x200xf32, #tpu.memory_space<vmem>>, vector<16x200xf32>
    %1 = arith.truncf %0 : vector<16x200xf32> to vector<16x200xbf16>
    %c0_1 = arith.constant 0 : index
    %c0_2 = arith.constant 0 : index
    %2 = vector.load %arg2[%c0_1, %c0_2] : memref<200x896xbf16, #tpu.memory_space<vmem>>, vector<200x896xbf16>
    %cst = arith.constant dense<0.000000e+00> : vector<16x896xf32>
    %3 = tpu.matmul %1, %2, %cst {dimension_numbers = #tpu.dot_dimension_numbers<[1], [0], [0], [1], [0, 0, 1, 1], [], []>} : vector<16x200xbf16>, vector<200x896xbf16>, vector<16x896xf32> -> vector<16x896xf32>
    %c0_3 = arith.constant 0 : index
    %c0_4 = arith.constant 0 : index
    %4 = vector.load %arg3[%c0_3, %c0_4] : memref<1x896xf32, #tpu.memory_space<vmem>>, vector<1x896xf32>
    %5 = vector.broadcast %4 : vector<1x896xf32> to vector<16x896xf32>
    %6 = arith.addf %3, %5 : vector<16x896xf32>
    %cst_5 = arith.constant 0.000000e+00 : f32
    %7 = vector.broadcast %cst_5 : f32 to vector<16x896xf32>
    %8 = arith.maximumf %6, %7 : vector<16x896xf32>
    %9 = arith.truncf %8 : vector<16x896xf32> to vector<16x896xbf16>
    %c0_6 = arith.constant 0 : index
    %c0_7 = arith.constant 0 : index
    %10 = vector.load %arg4[%c0_6, %c0_7] : memref<896x200xbf16, #tpu.memory_space<vmem>>, vector<896x200xbf16>
    %cst_8 = arith.constant dense<0.000000e+00> : vector<16x200xf32>
    %11 = tpu.matmul %9, %10, %cst_8 {dimension_numbers = #tpu.dot_dimension_numbers<[1], [0], [0], [1], [0, 0, 1, 1], [], []>} : vector<16x896xbf16>, vector<896x200xbf16>, vector<16x200xf32> -> vector<16x200xf32>
    %c0_9 = arith.constant 0 : index
    %c0_10 = arith.constant 0 : index
    %12 = vector.load %arg5[%c0_9, %c0_10] : memref<1x200xf32, #tpu.memory_space<vmem>>, vector<1x200xf32>
    %13 = vector.broadcast %12 : vector<1x200xf32> to vector<16x200xf32>
    %14 = arith.addf %11, %13 : vector<16x200xf32>
    %c0_11 = arith.constant 0 : index
    %c0_12 = arith.constant 0 : index
    %15 = vector.load %arg6[%c0_11, %c0_12] : memref<16x200xf32, #tpu.memory_space<vmem>>, vector<16x200xf32>
    tpu.vector_store %arg6[%c0_11, %c0_12], %14 {strides = array<i32>} : memref<16x200xf32, #tpu.memory_space<vmem>>, vector<16x200xf32>,
    return
  }
  func.func @transform_0(%arg0: i32) -> (i32, i32) {
    %c0_i32 = arith.constant 0 : i32
    %c0_i32_0 = arith.constant 0 : i32
    return %arg0, %c0_i32 : i32, i32
  }
  func.func @transform_1(%arg0: i32) -> (i32, i32) {
    %c0_i32 = arith.constant 0 : i32
    %c0_i32_0 = arith.constant 0 : i32
    %c0_i32_1 = arith.constant 0 : i32
    return %c0_i32, %c0_i32_0 : i32, i32
  }
  func.func @transform_2(%arg0: i32) -> (i32, i32) {
    %c0_i32 = arith.constant 0 : i32
    %c0_i32_0 = arith.constant 0 : i32
    %c0_i32_1 = arith.constant 0 : i32
    return %c0_i32, %c0_i32_0 : i32, i32
  }
  func.func @transform_3(%arg0: i32) -> (i32, i32) {
    %c0_i32 = arith.constant 0 : i32
    %c0_i32_0 = arith.constant 0 : i32
    %c0_i32_1 = arith.constant 0 : i32
    return %c0_i32, %c0_i32_0 : i32, i32
  }
  func.func @transform_4(%arg0: i32) -> (i32, i32) {
    %c0_i32 = arith.constant 0 : i32
    %c0_i32_0 = arith.constant 0 : i32
    %c0_i32_1 = arith.constant 0 : i32
    return %c0_i32, %c0_i32_0 : i32, i32
  }
  func.func @transform_5(%arg0: i32) -> (i32, i32) {
    %c0_i32 = arith.constant 0 : i32
    %c0_i32_0 = arith.constant 0 : i32
    return %arg0, %c0_i32 : i32, i32
  }
}

</mosaic_0001>

<llo_original>
// kernel: tpu_custom_call.1
$region0: #{tpu_custom_call.1}
  #allocation0 [shape = 'u32[]', space=smem, size = 0x4, offset = 0x4, fixed_abs, tag = 'smem constant byte address 0x4 - core index']
  #allocation1 [shape = 'u32[144,128]{1,0:T(1,128)}', space=vmem, size = 0x12000, scoped, tag = 'internal scratch']
  %s0 = inlined_call_operand.vmem [shape: f32[16,200], index: 0, kind: input, shape index: {}]
  %s1 = inlined_call_operand.vmem [shape: bf16[200,896], index: 1, kind: input, shape index: {}]
  %s2 = inlined_call_operand.vmem [shape: f32[1,896], index: 2, kind: input, shape index: {}]
  %s3 = inlined_call_operand.vmem [shape: bf16[896,200], index: 3, kind: input, shape index: {}]
  %s4 = inlined_call_operand.vmem [shape: f32[1,200], index: 4, kind: input, shape index: {}]
  %s5 = inlined_call_operand.hbm [shape: f32[16,200], index: 5, kind: output, shape index: {}]
  %s6 = sld [smem:[#allocation0]]
  $region30: #{tpu_custom_call.1} parent=0
    _
  %s8 = ssub.s32 1, %s6
  %s9 = scalar_select 0, %s8, %s6
  $region1: #{tpu_custom_call.1} parent=0
    #allocation2 [shape = 'u8[16384]{0}', space=vmem, size = 0x4000, scoped, tag = 'output window, operand 0, single buffered']
    #allocation3 [shape = 's32[1]{0}', space=sflag, size = 0x4, scoped, tag = 'scoped memory for tpu_custom_call.1']
    %10 = vsyncpa [#allocation3], 0
    // Predicated region
    $region2: #{tpu_custom_call.1} parent=1 // pred_check
      _
    $region3: #{tpu_custom_call.1} parent=1 // pred_check_branch
      %12 = sbr.rel (0) target = $region5
    $region4: #{tpu_custom_call.1} parent=1 // pred_region
      _
    $region5: #{tpu_custom_call.1} parent=1 // pred_fallthru
      _
    // Predicated region
    $region6: #{tpu_custom_call.1} parent=1 // pred_check
      _
    $region7: #{tpu_custom_call.1} parent=1 // pred_check_branch
      %14 = sbr.rel (0) target = $region9
    $region8: #{tpu_custom_call.1} parent=1 // pred_region
      _
    $region9: #{tpu_custom_call.1} parent=1 // pred_fallthru
      _
    // Predicated region
    $region10: #{tpu_custom_call.1} parent=1 // pred_check
      _
    $region11: #{tpu_custom_call.1} parent=1 // pred_check_branch
      %16 = sbr.rel (0) target = $region13
    $region12: #{tpu_custom_call.1} parent=1 // pred_region
      _
    $region13: #{tpu_custom_call.1} parent=1 // pred_fallthru
      _
    // Predicated region
    $region14: #{tpu_custom_call.1} parent=1 // pred_check
      _
    $region15: #{tpu_custom_call.1} parent=1 // pred_check_branch
      %18 = sbr.rel (0) target = $region17
    $region16: #{tpu_custom_call.1} parent=1 // pred_region
      _
    $region17: #{tpu_custom_call.1} parent=1 // pred_fallthru
      _
    // Predicated region
    $region18: #{tpu_custom_call.1} parent=1 // pred_check
      _
    $region19: #{tpu_custom_call.1} parent=1 // pred_check_branch
      %20 = sbr.rel (0) target = $region21
    $region20: #{tpu_custom_call.1} parent=1 // pred_region
      _
    $region21: #{tpu_custom_call.1} parent=1 // pred_fallthru
      _
    %v22 = vld [vmem:[%s0] sm:$0xff]
    %v23 = vld [vmem:[%s0 + $0x8] sm:$0xff]
    %v24 = vld [vmem:[%s0 + $0x10] sm:$0xff]
    %v25 = vld [vmem:[%s0 + $0x18] sm:$0xff]
    %v26 = vpack.c.bf16 %v24, %v22
    %v27 = vpack.c.bf16 %v25, %v23
    %v28 = vld [vmem:[%s1] sm:$0xff]
    %v29 = vld [vmem:[%s1 + $0x8] sm:$0xff]
    %v30 = vld [vmem:[%s1 + $0x10] sm:$0xff]
    %v31 = vld [vmem:[%s1 + $0x18] sm:$0xf]
    %v32 = vld [vmem:[%s1 + $0x1c] sm:$0xff]
    %v33 = vld [vmem:[%s1 + $0x24] sm:$0xff]
    %v34 = vld [vmem:[%s1 + $0x2c] sm:$0xff]
    %v35 = vld [vmem:[%s1 + $0x34] sm:$0xf]
    %v36 = vld [vmem:[%s1 + $0x38] sm:$0xff]
    %v37 = vld [vmem:[%s1 + $0x40] sm:$0xff]
    %v38 = vld [vmem:[%s1 + $0x48] sm:$0xff]
    %v39 = vld [vmem:[%s1 + $0x50] sm:$0xf]
    %v40 = vld [vmem:[%s1 + $0x54] sm:$0xff]
    %v41 = vld [vmem:[%s1 + $0x5c] sm:$0xff]
    %v42 = vld [vmem:[%s1 + $0x64] sm:$0xff]
    %v43 = vld [vmem:[%s1 + $0x6c] sm:$0xf]
    %v44 = vld [vmem:[%s1 + $0x70] sm:$0xff]
    %v45 = vld [vmem:[%s1 + $0x78] sm:$0xff]
    %v46 = vld [vmem:[%s1 + $0x80] sm:$0xff]
    %v47 = vld [vmem:[%s1 + $0x88] sm:$0xf]
    %v48 = vld [vmem:[%s1 + $0x8c] sm:$0xff]
    %v49 = vld [vmem:[%s1 + $0x94] sm:$0xff]
    %v50 = vld [vmem:[%s1 + $0x9c] sm:$0xff]
    %v51 = vld [vmem:[%s1 + $0xa4] sm:$0xf]
    %v52 = vld [vmem:[%s1 + $0xa8] sm:$0xff]
    %v53 = vld [vmem:[%s1 + $0xb0] sm:$0xff]
    %v54 = vld [vmem:[%s1 + $0xb8] sm:$0xff]
    %v55 = vld [vmem:[%s1 + $0xc0] sm:$0xf]
    %v56 = vld [vmem:[%s1 + $0xc4] sm:$0xff]
    %v57 = vld [vmem:[%s1 + $0xcc] sm:$0xff]
    %v58 = vld [vmem:[%s1 + $0xd4] sm:$0xff]
    %v59 = vld [vmem:[%s1 + $0xdc] sm:$0xf]
    %v60 = vld [vmem:[%s1 + $0xe0] sm:$0xff]
    %v61 = vld [vmem:[%s1 + $0xe8] sm:$0xff]
    %v62 = vld [vmem:[%s1 + $0xf0] sm:$0xff]
    %v63 = vld [vmem:[%s1 + $0xf8] sm:$0xf]
    %v64 = vld [vmem:[%s1 + $0xfc] sm:$0xff]
    %v65 = vld [vmem:[%s1 + $0x104] sm:$0xff]
    %v66 = vld [vmem:[%s1 + $0x10c] sm:$0xff]
    %v67 = vld [vmem:[%s1 + $0x114] sm:$0xf]
    %v68 = vld [vmem:[%s1 + $0x118] sm:$0xff]
    %v69 = vld [vmem:[%s1 + $0x120] sm:$0xff]
    %v70 = vld [vmem:[%s1 + $0x128] sm:$0xff]
    %v71 = vld [vmem:[%s1 + $0x130] sm:$0xf]
    %v72 = vld [vmem:[%s1 + $0x134] sm:$0xff]
    %v73 = vld [vmem:[%s1 + $0x13c] sm:$0xff]
    %v74 = vld [vmem:[%s1 + $0x144] sm:$0xff]
    %v75 = vld [vmem:[%s1 + $0x14c] sm:$0xf]
    %v76 = vld [vmem:[%s1 + $0x150] sm:$0xff]
    %v77 = vld [vmem:[%s1 + $0x158] sm:$0xff]
    %v78 = vld [vmem:[%s1 + $0x160] sm:$0xff]
    %v79 = vld [vmem:[%s1 + $0x168] sm:$0xf]
    %v80 = vld [vmem:[%s1 + $0x16c] sm:$0xff]
    %v81 = vld [vmem:[%s1 + $0x174] sm:$0xff]
    %v82 = vld [vmem:[%s1 + $0x17c] sm:$0xff]
    %v83 = vld [vmem:[%s1 + $0x184] sm:$0xf]
    %v84 = vld [vmem:[%s1 + $0x188] sm:$0xff]
    %v85 = vld [vmem:[%s1 + $0x190] sm:$0xff]
    %v86 = vld [vmem:[%s1 + $0x198] sm:$0xff]
    %v87 = vld [vmem:[%s1 + $0x1a0] sm:$0xf]
    %v88 = vld [vmem:[%s1 + $0x1a4] sm:$0xff]
    %v89 = vld [vmem:[%s1 + $0x1ac] sm:$0xff]
    %v90 = vld [vmem:[%s1 + $0x1b4] sm:$0xff]
    %v91 = vld [vmem:[%s1 + $0x1bc] sm:$0xf]
    %v92 = vld [vmem:[%s1 + $0x1c0] sm:$0xff]
    %v93 = vld [vmem:[%s1 + $0x1c8] sm:$0xff]
    %v94 = vld [vmem:[%s1 + $0x1d0] sm:$0xff]
    %v95 = vld [vmem:[%s1 + $0x1d8] sm:$0xf]
    %v96 = vld [vmem:[%s1 + $0x1dc] sm:$0xff]
    %v97 = vld [vmem:[%s1 + $0x1e4] sm:$0xff]
    %v98 = vld [vmem:[%s1 + $0x1ec] sm:$0xff]
    %v99 = vld [vmem:[%s1 + $0x1f4] sm:$0xf]
    %v100 = vld [vmem:[%s1 + $0x1f8] sm:$0xff]
    %v101 = vld [vmem:[%s1 + $0x200] sm:$0xff]
    %v102 = vld [vmem:[%s1 + $0x208] sm:$0xff]
    %v103 = vld [vmem:[%s1 + $0x210] sm:$0xf]
    %v104 = vld [vmem:[%s1 + $0x214] sm:$0xff]
    %v105 = vld [vmem:[%s1 + $0x21c] sm:$0xff]
    %v106 = vld [vmem:[%s1 + $0x224] sm:$0xff]
    %v107 = vld [vmem:[%s1 + $0x22c] sm:$0xf]
    %v108 = vld [vmem:[%s1 + $0x230] sm:$0xff]
    %v109 = vld [vmem:[%s1 + $0x238] sm:$0xff]
    %v110 = vld [vmem:[%s1 + $0x240] sm:$0xff]
    %v111 = vld [vmem:[%s1 + $0x248] sm:$0xf]
    %v112 = vld [vmem:[%s1 + $0x24c] sm:$0xff]
    %v113 = vld [vmem:[%s1 + $0x254] sm:$0xff]
    %v114 = vld [vmem:[%s1 + $0x25c] sm:$0xff]
    %v115 = vld [vmem:[%s1 + $0x264] sm:$0xf]
    %v116 = vld [vmem:[%s1 + $0x268] sm:$0xff]
    %v117 = vld [vmem:[%s1 + $0x270] sm:$0xff]
    %v118 = vld [vmem:[%s1 + $0x278] sm:$0xff]
    %v119 = vld [vmem:[%s1 + $0x280] sm:$0xf]
    %v120 = vld [vmem:[%s1 + $0x284] sm:$0xff]
    %v121 = vld [vmem:[%s1 + $0x28c] sm:$0xff]
    %v122 = vld [vmem:[%s1 + $0x294] sm:$0xff]
    %v123 = vld [vmem:[%s1 + $0x29c] sm:$0xf]
    %v124 = vld [vmem:[%s1 + $0x2a0] sm:$0xff]
    %v125 = vld [vmem:[%s1 + $0x2a8] sm:$0xff]
    %v126 = vld [vmem:[%s1 + $0x2b0] sm:$0xff]
    %v127 = vld [vmem:[%s1 + $0x2b8] sm:$0xf]
    %v128 = vld [vmem:[%s2] sm:$0xff]
    %v130 = vlaneseq
    %v131 = vshrl.u32 %v130, 7
    %v132 = vsub.s32 0, %v131
    %v133 = vrot.slane %v128, %v132
    %v134 = vlaneseq
    %v135 = vshrl.u32 %v134, 7
    %v136 = vsub.s32 1, %v135
    %v137 = vrot.slane %v128, %v136
    %v138 = vlaneseq
    %v139 = vshrl.u32 %v138, 7
    %v140 = vsub.s32 2, %v139
    %v141 = vrot.slane %v128, %v140
    %v142 = vlaneseq
    %v143 = vshrl.u32 %v142, 7
    %v144 = vsub.s32 3, %v143
    %v145 = vrot.slane %v128, %v144
    %v146 = vlaneseq
    %v147 = vshrl.u32 %v146, 7
    %v148 = vsub.s32 4, %v147
    %v149 = vrot.slane %v128, %v148
    %v150 = vlaneseq
    %v151 = vshrl.u32 %v150, 7
    %v152 = vsub.s32 5, %v151
    %v153 = vrot.slane %v128, %v152
    %v154 = vlaneseq
    %v155 = vshrl.u32 %v154, 7
    %v156 = vsub.s32 6, %v155
    %v157 = vrot.slane %v128, %v156
    %v265 = vunpack.c.l.b16 %v28
    %v266 = vunpack.c.h.b16 %v28
    %v267 = vunpack.c.l.b16 %v29
    %v268 = vunpack.c.h.b16 %v29
    %v269 = vunpack.c.l.b16 %v30
    %v270 = vunpack.c.h.b16 %v30
    %v271 = vunpack.c.l.b16 %v31
    %v272 = vunpack.c.l.b16 %v32
    %v273 = vunpack.c.h.b16 %v32
    %v274 = vunpack.c.l.b16 %v33
    %v275 = vunpack.c.h.b16 %v33
    %v276 = vunpack.c.l.b16 %v34
    %v277 = vunpack.c.h.b16 %v34
    %v278 = vunpack.c.l.b16 %v35
    %v279 = vunpack.c.l.b16 %v36
    %v280 = vunpack.c.h.b16 %v36
    %v281 = vunpack.c.l.b16 %v37
    %v282 = vunpack.c.h.b16 %v37
    %v283 = vunpack.c.l.b16 %v38
    %v284 = vunpack.c.h.b16 %v38
    %v285 = vunpack.c.l.b16 %v39
    %v286 = vunpack.c.l.b16 %v40
    %v287 = vunpack.c.h.b16 %v40
    %v288 = vunpack.c.l.b16 %v41
    %v289 = vunpack.c.h.b16 %v41
    %v290 = vunpack.c.l.b16 %v42
    %v291 = vunpack.c.h.b16 %v42
    %v292 = vunpack.c.l.b16 %v43
    %v293 = vunpack.c.l.b16 %v44
    %v294 = vunpack.c.h.b16 %v44
    %v295 = vunpack.c.l.b16 %v45
    %v296 = vunpack.c.h.b16 %v45
    %v297 = vunpack.c.l.b16 %v46
    %v298 = vunpack.c.h.b16 %v46
    %v299 = vunpack.c.l.b16 %v47
    %v300 = vunpack.c.l.b16 %v48
    %v301 = vunpack.c.h.b16 %v48
    %v302 = vunpack.c.l.b16 %v49
    %v303 = vunpack.c.h.b16 %v49
    %v304 = vunpack.c.l.b16 %v50
    %v305 = vunpack.c.h.b16 %v50
    %v306 = vunpack.c.l.b16 %v51
    %v307 = vunpack.c.l.b16 %v52
    %v308 = vunpack.c.h.b16 %v52
    %v309 = vunpack.c.l.b16 %v53
    %v310 = vunpack.c.h.b16 %v53
    %v311 = vunpack.c.l.b16 %v54
    %v312 = vunpack.c.h.b16 %v54
    %v313 = vunpack.c.l.b16 %v55
    %v314 = vunpack.c.l.b16 %v56
    %v315 = vunpack.c.h.b16 %v56
    %v316 = vunpack.c.l.b16 %v57
    %v317 = vunpack.c.h.b16 %v57
    %v318 = vunpack.c.l.b16 %v58
    %v319 = vunpack.c.h.b16 %v58
    %v320 = vunpack.c.l.b16 %v59
    %v321 = vunpack.c.l.b16 %v60
    %v322 = vunpack.c.h.b16 %v60
    %v323 = vunpack.c.l.b16 %v61
    %v324 = vunpack.c.h.b16 %v61
    %v325 = vunpack.c.l.b16 %v62
    %v326 = vunpack.c.h.b16 %v62
    %v327 = vunpack.c.l.b16 %v63
    %v328 = vunpack.c.l.b16 %v64
    %v329 = vunpack.c.h.b16 %v64
    %v330 = vunpack.c.l.b16 %v65
    %v331 = vunpack.c.h.b16 %v65
    %v332 = vunpack.c.l.b16 %v66
    %v333 = vunpack.c.h.b16 %v66
    %v334 = vunpack.c.l.b16 %v67
    %v335 = vunpack.c.l.b16 %v68
    %v336 = vunpack.c.h.b16 %v68
    %v337 = vunpack.c.l.b16 %v69
    %v338 = vunpack.c.h.b16 %v69
    %v339 = vunpack.c.l.b16 %v70
    %v340 = vunpack.c.h.b16 %v70
    %v341 = vunpack.c.l.b16 %v71
    %v342 = vunpack.c.l.b16 %v72
    %v343 = vunpack.c.h.b16 %v72
    %v344 = vunpack.c.l.b16 %v73
    %v345 = vunpack.c.h.b16 %v73
    %v346 = vunpack.c.l.b16 %v74
    %v347 = vunpack.c.h.b16 %v74
    %v348 = vunpack.c.l.b16 %v75
    %v349 = vunpack.c.l.b16 %v76
    %v350 = vunpack.c.h.b16 %v76
    %v351 = vunpack.c.l.b16 %v77
    %v352 = vunpack.c.h.b16 %v77
    %v353 = vunpack.c.l.b16 %v78
    %v354 = vunpack.c.h.b16 %v78
    %v355 = vunpack.c.l.b16 %v79
    %v356 = vunpack.c.l.b16 %v80
    %v357 = vunpack.c.h.b16 %v80
    %v358 = vunpack.c.l.b16 %v81
    %v359 = vunpack.c.h.b16 %v81
    %v360 = vunpack.c.l.b16 %v82
    %v361 = vunpack.c.h.b16 %v82
    %v362 = vunpack.c.l.b16 %v83
    %v363 = vunpack.c.l.b16 %v84
    %v364 = vunpack.c.h.b16 %v84
    %v365 = vunpack.c.l.b16 %v85
    %v366 = vunpack.c.h.b16 %v85
    %v367 = vunpack.c.l.b16 %v86
    %v368 = vunpack.c.h.b16 %v86
    %v369 = vunpack.c.l.b16 %v87
    %v370 = vunpack.c.l.b16 %v88
    %v371 = vunpack.c.h.b16 %v88
    %v372 = vunpack.c.l.b16 %v89
    %v373 = vunpack.c.h.b16 %v89
    %v374 = vunpack.c.l.b16 %v90
    %v375 = vunpack.c.h.b16 %v90
    %v376 = vunpack.c.l.b16 %v91
    %v377 = vunpack.c.l.b16 %v92
    %v378 = vunpack.c.h.b16 %v92
    %v379 = vunpack.c.l.b16 %v93
    %v380 = vunpack.c.h.b16 %v93
    %v381 = vunpack.c.l.b16 %v94
    %v382 = vunpack.c.h.b16 %v94
    %v383 = vunpack.c.l.b16 %v95
    %v384 = vunpack.c.l.b16 %v96
    %v385 = vunpack.c.h.b16 %v96
    %v386 = vunpack.c.l.b16 %v97
    %v387 = vunpack.c.h.b16 %v97
    %v388 = vunpack.c.l.b16 %v98
    %v389 = vunpack.c.h.b16 %v98
    %v390 = vunpack.c.l.b16 %v99
    %v391 = vunpack.c.l.b16 %v100
    %v392 = vunpack.c.h.b16 %v100
    %v393 = vunpack.c.l.b16 %v101
    %v394 = vunpack.c.h.b16 %v101
    %v395 = vunpack.c.l.b16 %v102
    %v396 = vunpack.c.h.b16 %v102
    %v397 = vunpack.c.l.b16 %v103
    %v398 = vunpack.c.l.b16 %v104
    %v399 = vunpack.c.h.b16 %v104
    %v400 = vunpack.c.l.b16 %v105
    %v401 = vunpack.c.h.b16 %v105
    %v402 = vunpack.c.l.b16 %v106
    %v403 = vunpack.c.h.b16 %v106
    %v404 = vunpack.c.l.b16 %v107
    %v405 = vunpack.c.l.b16 %v108
    %v406 = vunpack.c.h.b16 %v108
    %v407 = vunpack.c.l.b16 %v109
    %v408 = vunpack.c.h.b16 %v109
    %v409 = vunpack.c.l.b16 %v110
    %v410 = vunpack.c.h.b16 %v110
    %v411 = vunpack.c.l.b16 %v111
    %v412 = vunpack.c.l.b16 %v112
    %v413 = vunpack.c.h.b16 %v112
    %v414 = vunpack.c.l.b16 %v113
    %v415 = vunpack.c.h.b16 %v113
    %v416 = vunpack.c.l.b16 %v114
    %v417 = vunpack.c.h.b16 %v114
    %v418 = vunpack.c.l.b16 %v115
    %v419 = vunpack.c.l.b16 %v116
    %v420 = vunpack.c.h.b16 %v116
    %v421 = vunpack.c.l.b16 %v117
    %v422 = vunpack.c.h.b16 %v117
    %v423 = vunpack.c.l.b16 %v118
    %v424 = vunpack.c.h.b16 %v118
    %v425 = vunpack.c.l.b16 %v119
    %v426 = vunpack.c.l.b16 %v120
    %v427 = vunpack.c.h.b16 %v120
    %v428 = vunpack.c.l.b16 %v121
    %v429 = vunpack.c.h.b16 %v121
    %v430 = vunpack.c.l.b16 %v122
    %v431 = vunpack.c.h.b16 %v122
    %v432 = vunpack.c.l.b16 %v123
    %v433 = vunpack.c.l.b16 %v124
    %v434 = vunpack.c.h.b16 %v124
    %v435 = vunpack.c.l.b16 %v125
    %v436 = vunpack.c.h.b16 %v125
    %v437 = vunpack.c.l.b16 %v126
    %v438 = vunpack.c.h.b16 %v126
    %v439 = vunpack.c.l.b16 %v127
    %v440 = vpack.c.b16 %v272, %v265
    %v441 = vpack.c.b16 %v273, %v266
    %v442 = vpack.c.b16 %v274, %v267
    %v443 = vpack.c.b16 %v275, %v268
    %v444 = vpack.c.b16 %v276, %v269
    %v445 = vpack.c.b16 %v277, %v270
    %v446 = vpack.c.b16 %v278, %v271
    %v447 = vpack.c.b16 %v286, %v279
    %v448 = vpack.c.b16 %v287, %v280
    %v449 = vpack.c.b16 %v288, %v281
    %v450 = vpack.c.b16 %v289, %v282
    %v451 = vpack.c.b16 %v290, %v283
    %v452 = vpack.c.b16 %v291, %v284
    %v453 = vpack.c.b16 %v292, %v285
    %v454 = vpack.c.b16 %v300, %v293
    %v455 = vpack.c.b16 %v301, %v294
    %v456 = vpack.c.b16 %v302, %v295
    %v457 = vpack.c.b16 %v303, %v296
    %v458 = vpack.c.b16 %v304, %v297
    %v459 = vpack.c.b16 %v305, %v298
    %v460 = vpack.c.b16 %v306, %v299
    %v461 = vpack.c.b16 %v314, %v307
    %v462 = vpack.c.b16 %v315, %v308
    %v463 = vpack.c.b16 %v316, %v309
    %v464 = vpack.c.b16 %v317, %v310
    %v465 = vpack.c.b16 %v318, %v311
    %v466 = vpack.c.b16 %v319, %v312
    %v467 = vpack.c.b16 %v320, %v313
    %v468 = vpack.c.b16 %v328, %v321
    %v469 = vpack.c.b16 %v329, %v322
    %v470 = vpack.c.b16 %v330, %v323
    %v471 = vpack.c.b16 %v331, %v324
    %v472 = vpack.c.b16 %v332, %v325
    %v473 = vpack.c.b16 %v333, %v326
    %v474 = vpack.c.b16 %v334, %v327
    %v475 = vpack.c.b16 %v342, %v335
    %v476 = vpack.c.b16 %v343, %v336
    %v477 = vpack.c.b16 %v344, %v337
    %v478 = vpack.c.b16 %v345, %v338
    %v479 = vpack.c.b16 %v346, %v339
    %v480 = vpack.c.b16 %v347, %v340
    %v481 = vpack.c.b16 %v348, %v341
    %v482 = vpack.c.b16 %v356, %v349
    %v483 = vpack.c.b16 %v357, %v350
    %v484 = vpack.c.b16 %v358, %v351
    %v485 = vpack.c.b16 %v359, %v352
    %v486 = vpack.c.b16 %v360, %v353
    %v487 = vpack.c.b16 %v361, %v354
    %v488 = vpack.c.b16 %v362, %v355
    %v489 = vpack.c.b16 %v370, %v363
    %v490 = vpack.c.b16 %v371, %v364
    %v491 = vpack.c.b16 %v372, %v365
    %v492 = vpack.c.b16 %v373, %v366
    %v493 = vpack.c.b16 %v374, %v367
    %v494 = vpack.c.b16 %v375, %v368
    %v495 = vpack.c.b16 %v376, %v369
    %v496 = vpack.c.b16 %v384, %v377
    %v497 = vpack.c.b16 %v385, %v378
    %v498 = vpack.c.b16 %v386, %v379
    %v499 = vpack.c.b16 %v387, %v380
    %v500 = vpack.c.b16 %v388, %v381
    %v501 = vpack.c.b16 %v389, %v382
    %v502 = vpack.c.b16 %v390, %v383
    %v503 = vpack.c.b16 %v398, %v391
    %v504 = vpack.c.b16 %v399, %v392
    %v505 = vpack.c.b16 %v400, %v393
    %v506 = vpack.c.b16 %v401, %v394
    %v507 = vpack.c.b16 %v402, %v395
    %v508 = vpack.c.b16 %v403, %v396
    %v509 = vpack.c.b16 %v404, %v397
    %v510 = vpack.c.b16 %v412, %v405
    %v511 = vpack.c.b16 %v413, %v406
    %v512 = vpack.c.b16 %v414, %v407
    %v513 = vpack.c.b16 %v415, %v408
    %v514 = vpack.c.b16 %v416, %v409
    %v515 = vpack.c.b16 %v417, %v410
    %v516 = vpack.c.b16 %v418, %v411
    %v517 = vpack.c.b16 %v426, %v419
    %v518 = vpack.c.b16 %v427, %v420
    %v519 = vpack.c.b16 %v428, %v421
    %v520 = vpack.c.b16 %v429, %v422
    %v521 = vpack.c.b16 %v430, %v423
    %v522 = vpack.c.b16 %v431, %v424
    %v523 = vpack.c.b16 %v432, %v425
    %v524 = vpack.c.b16 %v433, %v433
    %v525 = vpack.c.b16 %v434, %v434
    %v526 = vpack.c.b16 %v435, %v435
    %v527 = vpack.c.b16 %v436, %v436
    %v528 = vpack.c.b16 %v437, %v437
    %v529 = vpack.c.b16 %v438, %v438
    %v530 = vpack.c.b16 %v439, %v439
    %vm615 = vcmask 588800
    %v617 = vsel %vm615, %v27, 0
    %vm619 = vcmask 1043456
    %v621 = vsel %vm619, %v524, 0
    %v624 = vsel %vm619, %v525, 0
    %v627 = vsel %vm619, %v526, 0
    %v630 = vsel %vm619, %v527, 0
    %v633 = vsel %vm619, %v528, 0
    %v636 = vsel %vm619, %v529, 0
    %v639 = vsel %vm619, %v530, 0
    %641 = vmatprep.subr.bf16.mxu0 %v490
    %642 = vmatpush1.bf16.msra.mxu0 %v489
    %643 = vmatprep.subr.bf16.mxu0 %v483
    %644 = vmatpush1.bf16.msra.mxu0 %v482
    %645 = vmatprep.subr.bf16.mxu0 %v476
    %646 = vmatpush1.bf16.msra.mxu0 %v475
    %647 = vmatprep.subr.bf16.mxu0 %v469
    %648 = vmatpush1.bf16.msra.mxu0 %v468
    %649 = vmatprep.subr.bf16.mxu0 %v462
    %650 = vmatpush1.bf16.msra.mxu0 %v461
    %651 = vmatprep.subr.bf16.mxu0 %v455
    %652 = vmatpush1.bf16.msra.mxu0 %v454
    %653 = vmatprep.subr.bf16.mxu0 %v448
    %654 = vmatpush1.bf16.msra.mxu0 %v447
    %655 = vmatprep.subr.bf16.mxu0 %v441
    %656 = vmatpush1.bf16.msra.mxu0 %v440
    %657 = vmatprep.subr.bf16.mxu0 0
    %658 = vmatpush2.bf16.msra.mxu0 0
    %659 = vmatprep.subr.bf16.mxu0 0
    %660 = vmatpush2.bf16.msra.mxu0 0
    %661 = vmatprep.subr.bf16.mxu0 0
    %662 = vmatpush2.bf16.msra.mxu0 0
    %663 = vmatprep.subr.bf16.mxu0 %v624
    %664 = vmatpush2.bf16.msra.mxu0 %v621
    %665 = vmatprep.subr.bf16.mxu0 %v518
    %666 = vmatpush2.bf16.msra.mxu0 %v517
    %667 = vmatprep.subr.bf16.mxu0 %v511
    %668 = vmatpush2.bf16.msra.mxu0 %v510
    %669 = vmatprep.subr.bf16.mxu0 %v504
    %670 = vmatpush2.bf16.msra.mxu0 %v503
    %671 = vmatprep.subr.bf16.mxu0 %v497
    %672 = vmatpush2.bf16.msra.mxu0 %v496
    %673 = vmatprep.mubr.bf16.mxu0 %v617
    %674 = vmatmul.mubr.bf16.gmra.mxu0 %v26
    %v675 = vpop.f32.mrf.mxu0
    %v676 = vadd.f32 %v133, %v675
    %v677 = vpop.f32.mrf.mxu0
    %v678 = vadd.f32 %v137, %v677
    %v679 = vpop.f32.mrf.mxu0
    %v680 = vadd.f32 %v133, %v679
    %v681 = vpop.f32.mrf.mxu0
    %v682 = vadd.f32 %v137, %v681
    %683 = vdwg.mxu0
    %684 = vmatprep.subr.bf16.mxu0 %v492
    %685 = vmatpush1.bf16.msra.mxu0 %v491
    %686 = vmatprep.subr.bf16.mxu0 %v485
    %687 = vmatpush1.bf16.msra.mxu0 %v484
    %688 = vmatprep.subr.bf16.mxu0 %v478
    %689 = vmatpush1.bf16.msra.mxu0 %v477
    %690 = vmatprep.subr.bf16.mxu0 %v471
    %691 = vmatpush1.bf16.msra.mxu0 %v470
    %692 = vmatprep.subr.bf16.mxu0 %v464
    %693 = vmatpush1.bf16.msra.mxu0 %v463
    %694 = vmatprep.subr.bf16.mxu0 %v457
    %695 = vmatpush1.bf16.msra.mxu0 %v456
    %696 = vmatprep.subr.bf16.mxu0 %v450
    %697 = vmatpush1.bf16.msra.mxu0 %v449
    %698 = vmatprep.subr.bf16.mxu0 %v443
    %699 = vmatpush1.bf16.msra.mxu0 %v442
    %700 = vmatprep.subr.bf16.mxu0 0
    %701 = vmatpush2.bf16.msra.mxu0 0
    %702 = vmatprep.subr.bf16.mxu0 0
    %703 = vmatpush2.bf16.msra.mxu0 0
    %704 = vmatprep.subr.bf16.mxu0 0
    %705 = vmatpush2.bf16.msra.mxu0 0
    %706 = vmatprep.subr.bf16.mxu0 %v630
    %707 = vmatpush2.bf16.msra.mxu0 %v627
    %708 = vmatprep.subr.bf16.mxu0 %v520
    %709 = vmatpush2.bf16.msra.mxu0 %v519
    %710 = vmatprep.subr.bf16.mxu0 %v513
    %711 = vmatpush2.bf16.msra.mxu0 %v512
    %712 = vmatprep.subr.bf16.mxu0 %v506
    %713 = vmatpush2.bf16.msra.mxu0 %v505
    %714 = vmatprep.subr.bf16.mxu0 %v499
    %715 = vmatpush2.bf16.msra.mxu0 %v498
    %716 = vmatprep.mubr.bf16.mxu0 %v617
    %717 = vmatmul.mubr.bf16.gmra.mxu0 %v26
    %v718 = vpop.f32.mrf.mxu0
    %v719 = vadd.f32 %v141, %v718
    %v720 = vpop.f32.mrf.mxu0
    %v721 = vadd.f32 %v145, %v720
    %v722 = vpop.f32.mrf.mxu0
    %v723 = vadd.f32 %v141, %v722
    %v724 = vpop.f32.mrf.mxu0
    %v725 = vadd.f32 %v145, %v724
    %726 = vdwg.mxu0
    %727 = vmatprep.subr.bf16.mxu0 %v494
    %728 = vmatpush1.bf16.msra.mxu0 %v493
    %729 = vmatprep.subr.bf16.mxu0 %v487
    %730 = vmatpush1.bf16.msra.mxu0 %v486
    %731 = vmatprep.subr.bf16.mxu0 %v480
    %732 = vmatpush1.bf16.msra.mxu0 %v479
    %733 = vmatprep.subr.bf16.mxu0 %v473
    %734 = vmatpush1.bf16.msra.mxu0 %v472
    %735 = vmatprep.subr.bf16.mxu0 %v466
    %736 = vmatpush1.bf16.msra.mxu0 %v465
    %737 = vmatprep.subr.bf16.mxu0 %v459
    %738 = vmatpush1.bf16.msra.mxu0 %v458
    %739 = vmatprep.subr.bf16.mxu0 %v452
    %740 = vmatpush1.bf16.msra.mxu0 %v451
    %741 = vmatprep.subr.bf16.mxu0 %v445
    %742 = vmatpush1.bf16.msra.mxu0 %v444
    %743 = vmatprep.subr.bf16.mxu0 0
    %744 = vmatpush2.bf16.msra.mxu0 0
    %745 = vmatprep.subr.bf16.mxu0 0
    %746 = vmatpush2.bf16.msra.mxu0 0
    %747 = vmatprep.subr.bf16.mxu0 0
    %748 = vmatpush2.bf16.msra.mxu0 0
    %749 = vmatprep.subr.bf16.mxu0 %v636
    %750 = vmatpush2.bf16.msra.mxu0 %v633
    %751 = vmatprep.subr.bf16.mxu0 %v522
    %752 = vmatpush2.bf16.msra.mxu0 %v521
    %753 = vmatprep.subr.bf16.mxu0 %v515
    %754 = vmatpush2.bf16.msra.mxu0 %v514
    %755 = vmatprep.subr.bf16.mxu0 %v508
    %756 = vmatpush2.bf16.msra.mxu0 %v507
    %757 = vmatprep.subr.bf16.mxu0 %v501
    %758 = vmatpush2.bf16.msra.mxu0 %v500
    %759 = vmatprep.mubr.bf16.mxu0 %v617
    %760 = vmatmul.mubr.bf16.gmra.mxu0 %v26
    %v761 = vpop.f32.mrf.mxu0
    %v762 = vadd.f32 %v149, %v761
    %v763 = vpop.f32.mrf.mxu0
    %v764 = vadd.f32 %v153, %v763
    %v765 = vpop.f32.mrf.mxu0
    %v766 = vadd.f32 %v149, %v765
    %v767 = vpop.f32.mrf.mxu0
    %v768 = vadd.f32 %v153, %v767
    %769 = vdwg.mxu0
    %770 = vmatprep.subr.bf16.mxu0 0
    %771 = vmatpush1.bf16.msra.mxu0 %v495
    %772 = vmatprep.subr.bf16.mxu0 0
    %773 = vmatpush1.bf16.msra.mxu0 %v488
    %774 = vmatprep.subr.bf16.mxu0 0
    %775 = vmatpush1.bf16.msra.mxu0 %v481
    %776 = vmatprep.subr.bf16.mxu0 0
    %777 = vmatpush1.bf16.msra.mxu0 %v474
    %778 = vmatprep.subr.bf16.mxu0 0
    %779 = vmatpush1.bf16.msra.mxu0 %v467
    %780 = vmatprep.subr.bf16.mxu0 0
    %781 = vmatpush1.bf16.msra.mxu0 %v460
    %782 = vmatprep.subr.bf16.mxu0 0
    %783 = vmatpush1.bf16.msra.mxu0 %v453
    %784 = vmatprep.subr.bf16.mxu0 0
    %785 = vmatpush1.bf16.msra.mxu0 %v446
    %786 = vmatprep.subr.bf16.mxu0 0
    %787 = vmatpush2.bf16.msra.mxu0 0
    %788 = vmatprep.subr.bf16.mxu0 0
    %789 = vmatpush2.bf16.msra.mxu0 0
    %790 = vmatprep.subr.bf16.mxu0 0
    %791 = vmatpush2.bf16.msra.mxu0 0
    %792 = vmatprep.subr.bf16.mxu0 0
    %793 = vmatpush2.bf16.msra.mxu0 %v639
    %794 = vmatprep.subr.bf16.mxu0 0
    %795 = vmatpush2.bf16.msra.mxu0 %v523
    %796 = vmatprep.subr.bf16.mxu0 0
    %797 = vmatpush2.bf16.msra.mxu0 %v516
    %798 = vmatprep.subr.bf16.mxu0 0
    %799 = vmatpush2.bf16.msra.mxu0 %v509
    %800 = vmatprep.subr.bf16.mxu0 0
    %801 = vmatpush2.bf16.msra.mxu0 %v502
    %802 = vmatprep.mubr.bf16.mxu0 %v617
    %803 = vmatmul.mubr.bf16.gmra.mxu0 %v26
    %v804 = vpop.f32.mrf.mxu0
    %v805 = vadd.f32 %v157, %v804
    %v806 = vpop.f32.mrf.mxu0
    %v807 = vpop.f32.mrf.mxu0
    %v808 = vadd.f32 %v157, %v807
    %v809 = vpop.f32.mrf.mxu0
    %810 = vdwg.mxu0
    %v811 = vmax.f32 %v676, 0.0
    %v812 = vmax.f32 %v678, 0.0
    %v813 = vmax.f32 %v719, 0.0
    %v814 = vmax.f32 %v721, 0.0
    %v815 = vmax.f32 %v762, 0.0
    %v816 = vmax.f32 %v764, 0.0
    %v817 = vmax.f32 %v805, 0.0
    %v818 = vmax.f32 %v680, 0.0
    %v819 = vmax.f32 %v682, 0.0
    %v820 = vmax.f32 %v723, 0.0
    %v821 = vmax.f32 %v725, 0.0
    %v822 = vmax.f32 %v766, 0.0
    %v823 = vmax.f32 %v768, 0.0
    %v824 = vmax.f32 %v808, 0.0
    %v825 = vpack.c.bf16 %v818, %v811
    %v826 = vpack.c.bf16 %v819, %v812
    %v827 = vpack.c.bf16 %v820, %v813
    %v828 = vpack.c.bf16 %v821, %v814
    %v829 = vpack.c.bf16 %v822, %v815
    %v830 = vpack.c.bf16 %v823, %v816
    %v831 = vpack.c.bf16 %v824, %v817
    %v832 = vld [vmem:[%s3] sm:$0xff]
    %v833 = vld [vmem:[%s3 + $0x8] sm:$0xff]
    %v834 = vld [vmem:[%s3 + $0x10] sm:$0xff]
    %v835 = vld [vmem:[%s3 + $0x18] sm:$0xff]
    %v836 = vld [vmem:[%s3 + $0x20] sm:$0xff]
    %v837 = vld [vmem:[%s3 + $0x28] sm:$0xff]
    %v838 = vld [vmem:[%s3 + $0x30] sm:$0xff]
    %v839 = vld [vmem:[%s3 + $0x38] sm:$0xff]
    %v840 = vld [vmem:[%s3 + $0x40] sm:$0xff]
    %v841 = vld [vmem:[%s3 + $0x48] sm:$0xff]
    %v842 = vld [vmem:[%s3 + $0x50] sm:$0xff]
    %v843 = vld [vmem:[%s3 + $0x58] sm:$0xff]
    %v844 = vld [vmem:[%s3 + $0x60] sm:$0xff]
    %v845 = vld [vmem:[%s3 + $0x68] sm:$0xff]
    %v846 = vld [vmem:[%s3 + $0x70] sm:$0xff]
    %v847 = vld [vmem:[%s3 + $0x78] sm:$0xff]
    %v848 = vld [vmem:[%s3 + $0x80] sm:$0xff]
    %v849 = vld [vmem:[%s3 + $0x88] sm:$0xff]
    %v850 = vld [vmem:[%s3 + $0x90] sm:$0xff]
    %v851 = vld [vmem:[%s3 + $0x98] sm:$0xff]
    %v852 = vld [vmem:[%s3 + $0xa0] sm:$0xff]
    %v853 = vld [vmem:[%s3 + $0xa8] sm:$0xff]
    %v854 = vld [vmem:[%s3 + $0xb0] sm:$0xff]
    %v855 = vld [vmem:[%s3 + $0xb8] sm:$0xff]
    %v856 = vld [vmem:[%s3 + $0xc0] sm:$0xff]
    %v857 = vld [vmem:[%s3 + $0xc8] sm:$0xff]
    %v858 = vld [vmem:[%s3 + $0xd0] sm:$0xff]
    %v859 = vld [vmem:[%s3 + $0xd8] sm:$0xff]
    %v860 = vld [vmem:[%s3 + $0xe0] sm:$0xff]
    %v861 = vld [vmem:[%s3 + $0xe8] sm:$0xff]
    %v862 = vld [vmem:[%s3 + $0xf0] sm:$0xff]
    %v863 = vld [vmem:[%s3 + $0xf8] sm:$0xff]
    %v864 = vld [vmem:[%s3 + $0x100] sm:$0xff]
    %v865 = vld [vmem:[%s3 + $0x108] sm:$0xff]
    %v866 = vld [vmem:[%s3 + $0x110] sm:$0xff]
    %v867 = vld [vmem:[%s3 + $0x118] sm:$0xff]
    %v868 = vld [vmem:[%s3 + $0x120] sm:$0xff]
    %v869 = vld [vmem:[%s3 + $0x128] sm:$0xff]
    %v870 = vld [vmem:[%s3 + $0x130] sm:$0xff]
    %v871 = vld [vmem:[%s3 + $0x138] sm:$0xff]
    %v872 = vld [vmem:[%s3 + $0x140] sm:$0xff]
    %v873 = vld [vmem:[%s3 + $0x148] sm:$0xff]
    %v874 = vld [vmem:[%s3 + $0x150] sm:$0xff]
    %v875 = vld [vmem:[%s3 + $0x158] sm:$0xff]
    %v876 = vld [vmem:[%s3 + $0x160] sm:$0xff]
    %v877 = vld [vmem:[%s3 + $0x168] sm:$0xff]
    %v878 = vld [vmem:[%s3 + $0x170] sm:$0xff]
    %v879 = vld [vmem:[%s3 + $0x178] sm:$0xff]
    %v880 = vld [vmem:[%s3 + $0x180] sm:$0xff]
    %v881 = vld [vmem:[%s3 + $0x188] sm:$0xff]
    %v882 = vld [vmem:[%s3 + $0x190] sm:$0xff]
    %v883 = vld [vmem:[%s3 + $0x198] sm:$0xff]
    %v884 = vld [vmem:[%s3 + $0x1a0] sm:$0xff]
    %v885 = vld [vmem:[%s3 + $0x1a8] sm:$0xff]
    %v886 = vld [vmem:[%s3 + $0x1b0] sm:$0xff]
    %v887 = vld [vmem:[%s3 + $0x1b8] sm:$0xff]
    %v888 = vld [vmem:[%s3 + $0x1c0] sm:$0xff]
    %v889 = vld [vmem:[%s3 + $0x1c8] sm:$0xff]
    %v890 = vld [vmem:[%s3 + $0x1d0] sm:$0xff]
    %v891 = vld [vmem:[%s3 + $0x1d8] sm:$0xff]
    %v892 = vld [vmem:[%s3 + $0x1e0] sm:$0xff]
    %v893 = vld [vmem:[%s3 + $0x1e8] sm:$0xff]
    %v894 = vld [vmem:[%s3 + $0x1f0] sm:$0xff]
    %v895 = vld [vmem:[%s3 + $0x1f8] sm:$0xff]
    %v896 = vld [vmem:[%s3 + $0x200] sm:$0xff]
    %v897 = vld [vmem:[%s3 + $0x208] sm:$0xff]
    %v898 = vld [vmem:[%s3 + $0x210] sm:$0xff]
    %v899 = vld [vmem:[%s3 + $0x218] sm:$0xff]
    %v900 = vld [vmem:[%s3 + $0x220] sm:$0xff]
    %v901 = vld [vmem:[%s3 + $0x228] sm:$0xff]
    %v902 = vld [vmem:[%s3 + $0x230] sm:$0xff]
    %v903 = vld [vmem:[%s3 + $0x238] sm:$0xff]
    %v904 = vld [vmem:[%s3 + $0x240] sm:$0xff]
    %v905 = vld [vmem:[%s3 + $0x248] sm:$0xff]
    %v906 = vld [vmem:[%s3 + $0x250] sm:$0xff]
    %v907 = vld [vmem:[%s3 + $0x258] sm:$0xff]
    %v908 = vld [vmem:[%s3 + $0x260] sm:$0xff]
    %v909 = vld [vmem:[%s3 + $0x268] sm:$0xff]
    %v910 = vld [vmem:[%s3 + $0x270] sm:$0xff]
    %v911 = vld [vmem:[%s3 + $0x278] sm:$0xff]
    %v912 = vld [vmem:[%s3 + $0x280] sm:$0xff]
    %v913 = vld [vmem:[%s3 + $0x288] sm:$0xff]
    %v914 = vld [vmem:[%s3 + $0x290] sm:$0xff]
    %v915 = vld [vmem:[%s3 + $0x298] sm:$0xff]
    %v916 = vld [vmem:[%s3 + $0x2a0] sm:$0xff]
    %v917 = vld [vmem:[%s3 + $0x2a8] sm:$0xff]
    %v918 = vld [vmem:[%s3 + $0x2b0] sm:$0xff]
    %v919 = vld [vmem:[%s3 + $0x2b8] sm:$0xff]
    %v920 = vld [vmem:[%s3 + $0x2c0] sm:$0xff]
    %v921 = vld [vmem:[%s3 + $0x2c8] sm:$0xff]
    %v922 = vld [vmem:[%s3 + $0x2d0] sm:$0xff]
    %v923 = vld [vmem:[%s3 + $0x2d8] sm:$0xff]
    %v924 = vld [vmem:[%s3 + $0x2e0] sm:$0xff]
    %v925 = vld [vmem:[%s3 + $0x2e8] sm:$0xff]
    %v926 = vld [vmem:[%s3 + $0x2f0] sm:$0xff]
    %v927 = vld [vmem:[%s3 + $0x2f8] sm:$0xff]
    %v928 = vld [vmem:[%s3 + $0x300] sm:$0xff]
    %v929 = vld [vmem:[%s3 + $0x308] sm:$0xff]
    %v930 = vld [vmem:[%s3 + $0x310] sm:$0xff]
    %v931 = vld [vmem:[%s3 + $0x318] sm:$0xff]
    %v932 = vld [vmem:[%s3 + $0x320] sm:$0xff]
    %v933 = vld [vmem:[%s3 + $0x328] sm:$0xff]
    %v934 = vld [vmem:[%s3 + $0x330] sm:$0xff]
    %v935 = vld [vmem:[%s3 + $0x338] sm:$0xff]
    %v936 = vld [vmem:[%s3 + $0x340] sm:$0xff]
    %v937 = vld [vmem:[%s3 + $0x348] sm:$0xff]
    %v938 = vld [vmem:[%s3 + $0x350] sm:$0xff]
    %v939 = vld [vmem:[%s3 + $0x358] sm:$0xff]
    %v940 = vld [vmem:[%s3 + $0x360] sm:$0xff]
    %v941 = vld [vmem:[%s3 + $0x368] sm:$0xff]
    %v942 = vld [vmem:[%s3 + $0x370] sm:$0xff]
    %v943 = vld [vmem:[%s3 + $0x378] sm:$0xff]
    %v944 = vld [vmem:[%s4] sm:$0x3]
    %v946 = vlaneseq
    %v947 = vshrl.u32 %v946, 7
    %v948 = vsub.s32 0, %v947
    %v949 = vrot.slane %v944, %v948
    %v950 = vlaneseq
    %v951 = vshrl.u32 %v950, 7
    %v952 = vsub.s32 1, %v951
    %v953 = vrot.slane %v944, %v952
    %v1068 = vunpack.c.l.b16 %v832
    %v1069 = vunpack.c.h.b16 %v832
    %v1070 = vunpack.c.l.b16 %v833
    %v1071 = vunpack.c.h.b16 %v833
    %v1072 = vunpack.c.l.b16 %v834
    %v1073 = vunpack.c.h.b16 %v834
    %v1074 = vunpack.c.l.b16 %v835
    %v1075 = vunpack.c.h.b16 %v835
    %v1076 = vunpack.c.l.b16 %v836
    %v1077 = vunpack.c.h.b16 %v836
    %v1078 = vunpack.c.l.b16 %v837
    %v1079 = vunpack.c.h.b16 %v837
    %v1080 = vunpack.c.l.b16 %v838
    %v1081 = vunpack.c.h.b16 %v838
    %v1082 = vunpack.c.l.b16 %v839
    %v1083 = vunpack.c.h.b16 %v839
    %v1084 = vunpack.c.l.b16 %v840
    %v1085 = vunpack.c.h.b16 %v840
    %v1086 = vunpack.c.l.b16 %v841
    %v1087 = vunpack.c.h.b16 %v841
    %v1088 = vunpack.c.l.b16 %v842
    %v1089 = vunpack.c.h.b16 %v842
    %v1090 = vunpack.c.l.b16 %v843
    %v1091 = vunpack.c.h.b16 %v843
    %v1092 = vunpack.c.l.b16 %v844
    %v1093 = vunpack.c.h.b16 %v844
    %v1094 = vunpack.c.l.b16 %v845
    %v1095 = vunpack.c.h.b16 %v845
    %v1096 = vunpack.c.l.b16 %v846
    %v1097 = vunpack.c.h.b16 %v846
    %v1098 = vunpack.c.l.b16 %v847
    %v1099 = vunpack.c.h.b16 %v847
    %v1100 = vunpack.c.l.b16 %v848
    %v1101 = vunpack.c.h.b16 %v848
    %v1102 = vunpack.c.l.b16 %v849
    %v1103 = vunpack.c.h.b16 %v849
    %v1104 = vunpack.c.l.b16 %v850
    %v1105 = vunpack.c.h.b16 %v850
    %v1106 = vunpack.c.l.b16 %v851
    %v1107 = vunpack.c.h.b16 %v851
    %v1108 = vunpack.c.l.b16 %v852
    %v1109 = vunpack.c.h.b16 %v852
    %v1110 = vunpack.c.l.b16 %v853
    %v1111 = vunpack.c.h.b16 %v853
    %v1112 = vunpack.c.l.b16 %v854
    %v1113 = vunpack.c.h.b16 %v854
    %v1114 = vunpack.c.l.b16 %v855
    %v1115 = vunpack.c.h.b16 %v855
    %v1116 = vunpack.c.l.b16 %v856
    %v1117 = vunpack.c.h.b16 %v856
    %v1118 = vunpack.c.l.b16 %v857
    %v1119 = vunpack.c.h.b16 %v857
    %v1120 = vunpack.c.l.b16 %v858
    %v1121 = vunpack.c.h.b16 %v858
    %v1122 = vunpack.c.l.b16 %v859
    %v1123 = vunpack.c.h.b16 %v859
    %v1124 = vunpack.c.l.b16 %v860
    %v1125 = vunpack.c.h.b16 %v860
    %v1126 = vunpack.c.l.b16 %v861
    %v1127 = vunpack.c.h.b16 %v861
    %v1128 = vunpack.c.l.b16 %v862
    %v1129 = vunpack.c.h.b16 %v862
    %v1130 = vunpack.c.l.b16 %v863
    %v1131 = vunpack.c.h.b16 %v863
    %v1132 = vunpack.c.l.b16 %v864
    %v1133 = vunpack.c.h.b16 %v864
    %v1134 = vunpack.c.l.b16 %v865
    %v1135 = vunpack.c.h.b16 %v865
    %v1136 = vunpack.c.l.b16 %v866
    %v1137 = vunpack.c.h.b16 %v866
    %v1138 = vunpack.c.l.b16 %v867
    %v1139 = vunpack.c.h.b16 %v867
    %v1140 = vunpack.c.l.b16 %v868
    %v1141 = vunpack.c.h.b16 %v868
    %v1142 = vunpack.c.l.b16 %v869
    %v1143 = vunpack.c.h.b16 %v869
    %v1144 = vunpack.c.l.b16 %v870
    %v1145 = vunpack.c.h.b16 %v870
    %v1146 = vunpack.c.l.b16 %v871
    %v1147 = vunpack.c.h.b16 %v871
    %v1148 = vunpack.c.l.b16 %v872
    %v1149 = vunpack.c.h.b16 %v872
    %v1150 = vunpack.c.l.b16 %v873
    %v1151 = vunpack.c.h.b16 %v873
    %v1152 = vunpack.c.l.b16 %v874
    %v1153 = vunpack.c.h.b16 %v874
    %v1154 = vunpack.c.l.b16 %v875
    %v1155 = vunpack.c.h.b16 %v875
    %v1156 = vunpack.c.l.b16 %v876
    %v1157 = vunpack.c.h.b16 %v876
    %v1158 = vunpack.c.l.b16 %v877
    %v1159 = vunpack.c.h.b16 %v877
    %v1160 = vunpack.c.l.b16 %v878
    %v1161 = vunpack.c.h.b16 %v878
    %v1162 = vunpack.c.l.b16 %v879
    %v1163 = vunpack.c.h.b16 %v879
    %v1164 = vunpack.c.l.b16 %v880
    %v1165 = vunpack.c.h.b16 %v880
    %v1166 = vunpack.c.l.b16 %v881
    %v1167 = vunpack.c.h.b16 %v881
    %v1168 = vunpack.c.l.b16 %v882
    %v1169 = vunpack.c.h.b16 %v882
    %v1170 = vunpack.c.l.b16 %v883
    %v1171 = vunpack.c.h.b16 %v883
    %v1172 = vunpack.c.l.b16 %v884
    %v1173 = vunpack.c.h.b16 %v884
    %v1174 = vunpack.c.l.b16 %v885
    %v1175 = vunpack.c.h.b16 %v885
    %v1176 = vunpack.c.l.b16 %v886
    %v1177 = vunpack.c.h.b16 %v886
    %v1178 = vunpack.c.l.b16 %v887
    %v1179 = vunpack.c.h.b16 %v887
    %v1180 = vunpack.c.l.b16 %v888
    %v1181 = vunpack.c.h.b16 %v888
    %v1182 = vunpack.c.l.b16 %v889
    %v1183 = vunpack.c.h.b16 %v889
    %v1184 = vunpack.c.l.b16 %v890
    %v1185 = vunpack.c.h.b16 %v890
    %v1186 = vunpack.c.l.b16 %v891
    %v1187 = vunpack.c.h.b16 %v891
    %v1188 = vunpack.c.l.b16 %v892
    %v1189 = vunpack.c.h.b16 %v892
    %v1190 = vunpack.c.l.b16 %v893
    %v1191 = vunpack.c.h.b16 %v893
    %v1192 = vunpack.c.l.b16 %v894
    %v1193 = vunpack.c.h.b16 %v894
    %v1194 = vunpack.c.l.b16 %v895
    %v1195 = vunpack.c.h.b16 %v895
    %v1196 = vunpack.c.l.b16 %v896
    %v1197 = vunpack.c.h.b16 %v896
    %v1198 = vunpack.c.l.b16 %v897
    %v1199 = vunpack.c.h.b16 %v897
    %v1200 = vunpack.c.l.b16 %v898
    %v1201 = vunpack.c.h.b16 %v898
    %v1202 = vunpack.c.l.b16 %v899
    %v1203 = vunpack.c.h.b16 %v899
    %v1204 = vunpack.c.l.b16 %v900
    %v1205 = vunpack.c.h.b16 %v900
    %v1206 = vunpack.c.l.b16 %v901
    %v1207 = vunpack.c.h.b16 %v901
    %v1208 = vunpack.c.l.b16 %v902
    %v1209 = vunpack.c.h.b16 %v902
    %v1210 = vunpack.c.l.b16 %v903
    %v1211 = vunpack.c.h.b16 %v903
    %v1212 = vunpack.c.l.b16 %v904
    %v1213 = vunpack.c.h.b16 %v904
    %v1214 = vunpack.c.l.b16 %v905
    %v1215 = vunpack.c.h.b16 %v905
    %v1216 = vunpack.c.l.b16 %v906
    %v1217 = vunpack.c.h.b16 %v906
    %v1218 = vunpack.c.l.b16 %v907
    %v1219 = vunpack.c.h.b16 %v907
    %v1220 = vunpack.c.l.b16 %v908
    %v1221 = vunpack.c.h.b16 %v908
    %v1222 = vunpack.c.l.b16 %v909
    %v1223 = vunpack.c.h.b16 %v909
    %v1224 = vunpack.c.l.b16 %v910
    %v1225 = vunpack.c.h.b16 %v910
    %v1226 = vunpack.c.l.b16 %v911
    %v1227 = vunpack.c.h.b16 %v911
    %v1228 = vunpack.c.l.b16 %v912
    %v1229 = vunpack.c.h.b16 %v912
    %v1230 = vunpack.c.l.b16 %v913
    %v1231 = vunpack.c.h.b16 %v913
    %v1232 = vunpack.c.l.b16 %v914
    %v1233 = vunpack.c.h.b16 %v914
    %v1234 = vunpack.c.l.b16 %v915
    %v1235 = vunpack.c.h.b16 %v915
    %v1236 = vunpack.c.l.b16 %v916
    %v1237 = vunpack.c.h.b16 %v916
    %v1238 = vunpack.c.l.b16 %v917
    %v1239 = vunpack.c.h.b16 %v917
    %v1240 = vunpack.c.l.b16 %v918
    %v1241 = vunpack.c.h.b16 %v918
    %v1242 = vunpack.c.l.b16 %v919
    %v1243 = vunpack.c.h.b16 %v919
    %v1244 = vunpack.c.l.b16 %v920
    %v1245 = vunpack.c.h.b16 %v920
    %v1246 = vunpack.c.l.b16 %v921
    %v1247 = vunpack.c.h.b16 %v921
    %v1248 = vunpack.c.l.b16 %v922
    %v1249 = vunpack.c.h.b16 %v922
    %v1250 = vunpack.c.l.b16 %v923
    %v1251 = vunpack.c.h.b16 %v923
    %v1252 = vunpack.c.l.b16 %v924
    %v1253 = vunpack.c.h.b16 %v924
    %v1254 = vunpack.c.l.b16 %v925
    %v1255 = vunpack.c.h.b16 %v925
    %v1256 = vunpack.c.l.b16 %v926
    %v1257 = vunpack.c.h.b16 %v926
    %v1258 = vunpack.c.l.b16 %v927
    %v1259 = vunpack.c.h.b16 %v927
    %v1260 = vunpack.c.l.b16 %v928
    %v1261 = vunpack.c.h.b16 %v928
    %v1262 = vunpack.c.l.b16 %v929
    %v1263 = vunpack.c.h.b16 %v929
    %v1264 = vunpack.c.l.b16 %v930
    %v1265 = vunpack.c.h.b16 %v930
    %v1266 = vunpack.c.l.b16 %v931
    %v1267 = vunpack.c.h.b16 %v931
    %v1268 = vunpack.c.l.b16 %v932
    %v1269 = vunpack.c.h.b16 %v932
    %v1270 = vunpack.c.l.b16 %v933
    %v1271 = vunpack.c.h.b16 %v933
    %v1272 = vunpack.c.l.b16 %v934
    %v1273 = vunpack.c.h.b16 %v934
    %v1274 = vunpack.c.l.b16 %v935
    %v1275 = vunpack.c.h.b16 %v935
    %v1276 = vunpack.c.l.b16 %v936
    %v1277 = vunpack.c.h.b16 %v936
    %v1278 = vunpack.c.l.b16 %v937
    %v1279 = vunpack.c.h.b16 %v937
    %v1280 = vunpack.c.l.b16 %v938
    %v1281 = vunpack.c.h.b16 %v938
    %v1282 = vunpack.c.l.b16 %v939
    %v1283 = vunpack.c.h.b16 %v939
    %v1284 = vunpack.c.l.b16 %v940
    %v1285 = vunpack.c.h.b16 %v940
    %v1286 = vunpack.c.l.b16 %v941
    %v1287 = vunpack.c.h.b16 %v941
    %v1288 = vunpack.c.l.b16 %v942
    %v1289 = vunpack.c.h.b16 %v942
    %v1290 = vunpack.c.l.b16 %v943
    %v1291 = vunpack.c.h.b16 %v943
    %v1292 = vpack.c.b16 %v1070, %v1068
    %v1293 = vpack.c.b16 %v1071, %v1069
    %v1294 = vpack.c.b16 %v1074, %v1072
    %v1295 = vpack.c.b16 %v1075, %v1073
    %v1296 = vpack.c.b16 %v1078, %v1076
    %v1297 = vpack.c.b16 %v1079, %v1077
    %v1298 = vpack.c.b16 %v1082, %v1080
    %v1299 = vpack.c.b16 %v1083, %v1081
    %v1300 = vpack.c.b16 %v1086, %v1084
    %v1301 = vpack.c.b16 %v1087, %v1085
    %v1302 = vpack.c.b16 %v1090, %v1088
    %v1303 = vpack.c.b16 %v1091, %v1089
    %v1304 = vpack.c.b16 %v1094, %v1092
    %v1305 = vpack.c.b16 %v1095, %v1093
    %v1306 = vpack.c.b16 %v1098, %v1096
    %v1307 = vpack.c.b16 %v1099, %v1097
    %v1308 = vpack.c.b16 %v1102, %v1100
    %v1309 = vpack.c.b16 %v1103, %v1101
    %v1310 = vpack.c.b16 %v1106, %v1104
    %v1311 = vpack.c.b16 %v1107, %v1105
    %v1312 = vpack.c.b16 %v1110, %v1108
    %v1313 = vpack.c.b16 %v1111, %v1109
    %v1314 = vpack.c.b16 %v1114, %v1112
    %v1315 = vpack.c.b16 %v1115, %v1113
    %v1316 = vpack.c.b16 %v1118, %v1116
    %v1317 = vpack.c.b16 %v1119, %v1117
    %v1318 = vpack.c.b16 %v1122, %v1120
    %v1319 = vpack.c.b16 %v1123, %v1121
    %v1320 = vpack.c.b16 %v1126, %v1124
    %v1321 = vpack.c.b16 %v1127, %v1125
    %v1322 = vpack.c.b16 %v1130, %v1128
    %v1323 = vpack.c.b16 %v1131, %v1129
    %v1324 = vpack.c.b16 %v1134, %v1132
    %v1325 = vpack.c.b16 %v1135, %v1133
    %v1326 = vpack.c.b16 %v1138, %v1136
    %v1327 = vpack.c.b16 %v1139, %v1137
    %v1328 = vpack.c.b16 %v1142, %v1140
    %v1329 = vpack.c.b16 %v1143, %v1141
    %v1330 = vpack.c.b16 %v1146, %v1144
    %v1331 = vpack.c.b16 %v1147, %v1145
    %v1332 = vpack.c.b16 %v1150, %v1148
    %v1333 = vpack.c.b16 %v1151, %v1149
    %v1334 = vpack.c.b16 %v1154, %v1152
    %v1335 = vpack.c.b16 %v1155, %v1153
    %v1336 = vpack.c.b16 %v1158, %v1156
    %v1337 = vpack.c.b16 %v1159, %v1157
    %v1338 = vpack.c.b16 %v1162, %v1160
    %v1339 = vpack.c.b16 %v1163, %v1161
    %v1340 = vpack.c.b16 %v1166, %v1164
    %v1341 = vpack.c.b16 %v1167, %v1165
    %v1342 = vpack.c.b16 %v1170, %v1168
    %v1343 = vpack.c.b16 %v1171, %v1169
    %v1344 = vpack.c.b16 %v1174, %v1172
    %v1345 = vpack.c.b16 %v1175, %v1173
    %v1346 = vpack.c.b16 %v1178, %v1176
    %v1347 = vpack.c.b16 %v1179, %v1177
    %v1348 = vpack.c.b16 %v1182, %v1180
    %v1349 = vpack.c.b16 %v1183, %v1181
    %v1350 = vpack.c.b16 %v1186, %v1184
    %v1351 = vpack.c.b16 %v1187, %v1185
    %v1352 = vpack.c.b16 %v1190, %v1188
    %v1353 = vpack.c.b16 %v1191, %v1189
    %v1354 = vpack.c.b16 %v1194, %v1192
    %v1355 = vpack.c.b16 %v1195, %v1193
    %v1356 = vpack.c.b16 %v1198, %v1196
    %v1357 = vpack.c.b16 %v1199, %v1197
    %v1358 = vpack.c.b16 %v1202, %v1200
    %v1359 = vpack.c.b16 %v1203, %v1201
    %v1360 = vpack.c.b16 %v1206, %v1204
    %v1361 = vpack.c.b16 %v1207, %v1205
    %v1362 = vpack.c.b16 %v1210, %v1208
    %v1363 = vpack.c.b16 %v1211, %v1209
    %v1364 = vpack.c.b16 %v1214, %v1212
    %v1365 = vpack.c.b16 %v1215, %v1213
    %v1366 = vpack.c.b16 %v1218, %v1216
    %v1367 = vpack.c.b16 %v1219, %v1217
    %v1368 = vpack.c.b16 %v1222, %v1220
    %v1369 = vpack.c.b16 %v1223, %v1221
    %v1370 = vpack.c.b16 %v1226, %v1224
    %v1371 = vpack.c.b16 %v1227, %v1225
    %v1372 = vpack.c.b16 %v1230, %v1228
    %v1373 = vpack.c.b16 %v1231, %v1229
    %v1374 = vpack.c.b16 %v1234, %v1232
    %v1375 = vpack.c.b16 %v1235, %v1233
    %v1376 = vpack.c.b16 %v1238, %v1236
    %v1377 = vpack.c.b16 %v1239, %v1237
    %v1378 = vpack.c.b16 %v1242, %v1240
    %v1379 = vpack.c.b16 %v1243, %v1241
    %v1380 = vpack.c.b16 %v1246, %v1244
    %v1381 = vpack.c.b16 %v1247, %v1245
    %v1382 = vpack.c.b16 %v1250, %v1248
    %v1383 = vpack.c.b16 %v1251, %v1249
    %v1384 = vpack.c.b16 %v1254, %v1252
    %v1385 = vpack.c.b16 %v1255, %v1253
    %v1386 = vpack.c.b16 %v1258, %v1256
    %v1387 = vpack.c.b16 %v1259, %v1257
    %v1388 = vpack.c.b16 %v1262, %v1260
    %v1389 = vpack.c.b16 %v1263, %v1261
    %v1390 = vpack.c.b16 %v1266, %v1264
    %v1391 = vpack.c.b16 %v1267, %v1265
    %v1392 = vpack.c.b16 %v1270, %v1268
    %v1393 = vpack.c.b16 %v1271, %v1269
    %v1394 = vpack.c.b16 %v1274, %v1272
    %v1395 = vpack.c.b16 %v1275, %v1273
    %v1396 = vpack.c.b16 %v1278, %v1276
    %v1397 = vpack.c.b16 %v1279, %v1277
    %v1398 = vpack.c.b16 %v1282, %v1280
    %v1399 = vpack.c.b16 %v1283, %v1281
    %v1400 = vpack.c.b16 %v1286, %v1284
    %v1401 = vpack.c.b16 %v1287, %v1285
    %v1402 = vpack.c.b16 %v1290, %v1288
    %v1403 = vpack.c.b16 %v1291, %v1289
    %1516 = vmatprep.subr.bf16.mxu0 %v1307
    %1517 = vmatpush1.bf16.msra.mxu0 %v1306
    %1518 = vmatprep.subr.bf16.mxu0 %v1305
    %1519 = vmatpush1.bf16.msra.mxu0 %v1304
    %1520 = vmatprep.subr.bf16.mxu0 %v1303
    %1521 = vmatpush1.bf16.msra.mxu0 %v1302
    %1522 = vmatprep.subr.bf16.mxu0 %v1301
    %1523 = vmatpush1.bf16.msra.mxu0 %v1300
    %1524 = vmatprep.subr.bf16.mxu0 %v1299
    %1525 = vmatpush1.bf16.msra.mxu0 %v1298
    %1526 = vmatprep.subr.bf16.mxu0 %v1297
    %1527 = vmatpush1.bf16.msra.mxu0 %v1296
    %1528 = vmatprep.subr.bf16.mxu0 %v1295
    %1529 = vmatpush1.bf16.msra.mxu0 %v1294
    %1530 = vmatprep.subr.bf16.mxu0 %v1293
    %1531 = vmatpush1.bf16.msra.mxu0 %v1292
    %1532 = vmatprep.subr.bf16.mxu0 %v1323
    %1533 = vmatpush2.bf16.msra.mxu0 %v1322
    %1534 = vmatprep.subr.bf16.mxu0 %v1321
    %1535 = vmatpush2.bf16.msra.mxu0 %v1320
    %1536 = vmatprep.subr.bf16.mxu0 %v1319
    %1537 = vmatpush2.bf16.msra.mxu0 %v1318
    %1538 = vmatprep.subr.bf16.mxu0 %v1317
    %1539 = vmatpush2.bf16.msra.mxu0 %v1316
    %1540 = vmatprep.subr.bf16.mxu0 %v1315
    %1541 = vmatpush2.bf16.msra.mxu0 %v1314
    %1542 = vmatprep.subr.bf16.mxu0 %v1313
    %1543 = vmatpush2.bf16.msra.mxu0 %v1312
    %1544 = vmatprep.subr.bf16.mxu0 %v1311
    %1545 = vmatpush2.bf16.msra.mxu0 %v1310
    %1546 = vmatprep.subr.bf16.mxu0 %v1309
    %1547 = vmatpush2.bf16.msra.mxu0 %v1308
    %1548 = vmatprep.mubr.bf16.mxu0 %v826
    %1549 = vmatmul.mubr.bf16.gmra.mxu0 %v825
    %v1550 = vpop.f32.mrf.mxu0
    %v1551 = vadd.f32 %v949, %v1550
    %v1552 = vpop.f32.mrf.mxu0
    %v1553 = vadd.f32 %v953, %v1552
    %v1554 = vpop.f32.mrf.mxu0
    %v1555 = vadd.f32 %v949, %v1554
    %v1556 = vpop.f32.mrf.mxu0
    %v1557 = vadd.f32 %v953, %v1556
    %1558 = vdwg.mxu0
    %1559 = vmatprep.subr.bf16.mxu0 %v1339
    %1560 = vmatpush1.bf16.msra.mxu0 %v1338
    %1561 = vmatprep.subr.bf16.mxu0 %v1337
    %1562 = vmatpush1.bf16.msra.mxu0 %v1336
    %1563 = vmatprep.subr.bf16.mxu0 %v1335
    %1564 = vmatpush1.bf16.msra.mxu0 %v1334
    %1565 = vmatprep.subr.bf16.mxu0 %v1333
    %1566 = vmatpush1.bf16.msra.mxu0 %v1332
    %1567 = vmatprep.subr.bf16.mxu0 %v1331
    %1568 = vmatpush1.bf16.msra.mxu0 %v1330
    %1569 = vmatprep.subr.bf16.mxu0 %v1329
    %1570 = vmatpush1.bf16.msra.mxu0 %v1328
    %1571 = vmatprep.subr.bf16.mxu0 %v1327
    %1572 = vmatpush1.bf16.msra.mxu0 %v1326
    %1573 = vmatprep.subr.bf16.mxu0 %v1325
    %1574 = vmatpush1.bf16.msra.mxu0 %v1324
    %1575 = vmatprep.subr.bf16.mxu0 %v1355
    %1576 = vmatpush2.bf16.msra.mxu0 %v1354
    %1577 = vmatprep.subr.bf16.mxu0 %v1353
    %1578 = vmatpush2.bf16.msra.mxu0 %v1352
    %1579 = vmatprep.subr.bf16.mxu0 %v1351
    %1580 = vmatpush2.bf16.msra.mxu0 %v1350
    %1581 = vmatprep.subr.bf16.mxu0 %v1349
    %1582 = vmatpush2.bf16.msra.mxu0 %v1348
    %1583 = vmatprep.subr.bf16.mxu0 %v1347
    %1584 = vmatpush2.bf16.msra.mxu0 %v1346
    %1585 = vmatprep.subr.bf16.mxu0 %v1345
    %1586 = vmatpush2.bf16.msra.mxu0 %v1344
    %1587 = vmatprep.subr.bf16.mxu0 %v1343
    %1588 = vmatpush2.bf16.msra.mxu0 %v1342
    %1589 = vmatprep.subr.bf16.mxu0 %v1341
    %1590 = vmatpush2.bf16.msra.mxu0 %v1340
    %1591 = vmatprep.mubr.bf16.mxu0 %v828
    %1592 = vmatmul.mubr.bf16.gmra.mxu0 %v827
    %v1593 = vpop.f32.mrf.mxu0
    %v1594 = vadd.f32 %v1551, %v1593
    %v1595 = vpop.f32.mrf.mxu0
    %v1596 = vadd.f32 %v1553, %v1595
    %v1597 = vpop.f32.mrf.mxu0
    %v1598 = vadd.f32 %v1555, %v1597
    %v1599 = vpop.f32.mrf.mxu0
    %v1600 = vadd.f32 %v1557, %v1599
    %1601 = vdwg.mxu0
    %1602 = vmatprep.subr.bf16.mxu0 %v1371
    %1603 = vmatpush1.bf16.msra.mxu0 %v1370
    %1604 = vmatprep.subr.bf16.mxu0 %v1369
    %1605 = vmatpush1.bf16.msra.mxu0 %v1368
    %1606 = vmatprep.subr.bf16.mxu0 %v1367
    %1607 = vmatpush1.bf16.msra.mxu0 %v1366
    %1608 = vmatprep.subr.bf16.mxu0 %v1365
    %1609 = vmatpush1.bf16.msra.mxu0 %v1364
    %1610 = vmatprep.subr.bf16.mxu0 %v1363
    %1611 = vmatpush1.bf16.msra.mxu0 %v1362
    %1612 = vmatprep.subr.bf16.mxu0 %v1361
    %1613 = vmatpush1.bf16.msra.mxu0 %v1360
    %1614 = vmatprep.subr.bf16.mxu0 %v1359
    %1615 = vmatpush1.bf16.msra.mxu0 %v1358
    %1616 = vmatprep.subr.bf16.mxu0 %v1357
    %1617 = vmatpush1.bf16.msra.mxu0 %v1356
    %1618 = vmatprep.subr.bf16.mxu0 %v1387
    %1619 = vmatpush2.bf16.msra.mxu0 %v1386
    %1620 = vmatprep.subr.bf16.mxu0 %v1385
    %1621 = vmatpush2.bf16.msra.mxu0 %v1384
    %1622 = vmatprep.subr.bf16.mxu0 %v1383
    %1623 = vmatpush2.bf16.msra.mxu0 %v1382
    %1624 = vmatprep.subr.bf16.mxu0 %v1381
    %1625 = vmatpush2.bf16.msra.mxu0 %v1380
    %1626 = vmatprep.subr.bf16.mxu0 %v1379
    %1627 = vmatpush2.bf16.msra.mxu0 %v1378
    %1628 = vmatprep.subr.bf16.mxu0 %v1377
    %1629 = vmatpush2.bf16.msra.mxu0 %v1376
    %1630 = vmatprep.subr.bf16.mxu0 %v1375
    %1631 = vmatpush2.bf16.msra.mxu0 %v1374
    %1632 = vmatprep.subr.bf16.mxu0 %v1373
    %1633 = vmatpush2.bf16.msra.mxu0 %v1372
    %1634 = vmatprep.mubr.bf16.mxu0 %v830
    %1635 = vmatmul.mubr.bf16.gmra.mxu0 %v829
    %v1636 = vpop.f32.mrf.mxu0
    %v1637 = vadd.f32 %v1594, %v1636
    %v1638 = vpop.f32.mrf.mxu0
    %v1639 = vadd.f32 %v1596, %v1638
    %v1640 = vpop.f32.mrf.mxu0
    %v1641 = vadd.f32 %v1598, %v1640
    %v1642 = vpop.f32.mrf.mxu0
    %v1643 = vadd.f32 %v1600, %v1642
    %1644 = vdwg.mxu0
    %1645 = vmatprep.subr.bf16.mxu0 %v1403
    %1646 = vmatpush1.bf16.msra.mxu0 %v1402
    %1647 = vmatprep.subr.bf16.mxu0 %v1401
    %1648 = vmatpush1.bf16.msra.mxu0 %v1400
    %1649 = vmatprep.subr.bf16.mxu0 %v1399
    %1650 = vmatpush1.bf16.msra.mxu0 %v1398
    %1651 = vmatprep.subr.bf16.mxu0 %v1397
    %1652 = vmatpush1.bf16.msra.mxu0 %v1396
    %1653 = vmatprep.subr.bf16.mxu0 %v1395
    %1654 = vmatpush1.bf16.msra.mxu0 %v1394
    %1655 = vmatprep.subr.bf16.mxu0 %v1393
    %1656 = vmatpush1.bf16.msra.mxu0 %v1392
    %1657 = vmatprep.subr.bf16.mxu0 %v1391
    %1658 = vmatpush1.bf16.msra.mxu0 %v1390
    %1659 = vmatprep.subr.bf16.mxu0 %v1389
    %1660 = vmatpush1.bf16.msra.mxu0 %v1388
    %1661 = vmatprep.subr.bf16.mxu0 0
    %1662 = vmatpush2.bf16.msra.mxu0 0
    %1663 = vmatprep.subr.bf16.mxu0 0
    %1664 = vmatpush2.bf16.msra.mxu0 0
    %1665 = vmatprep.subr.bf16.mxu0 0
    %1666 = vmatpush2.bf16.msra.mxu0 0
    %1667 = vmatprep.subr.bf16.mxu0 0
    %1668 = vmatpush2.bf16.msra.mxu0 0
    %1669 = vmatprep.subr.bf16.mxu0 0
    %1670 = vmatpush2.bf16.msra.mxu0 0
    %1671 = vmatprep.subr.bf16.mxu0 0
    %1672 = vmatpush2.bf16.msra.mxu0 0
    %1673 = vmatprep.subr.bf16.mxu0 0
    %1674 = vmatpush2.bf16.msra.mxu0 0
    %1675 = vmatprep.subr.bf16.mxu0 0
    %1676 = vmatpush2.bf16.msra.mxu0 0
    %1677 = vmatprep.mubr.bf16.mxu0 0
    %1678 = vmatmul.mubr.bf16.gmra.mxu0 %v831
    %v1679 = vpop.f32.mrf.mxu0
    %v1680 = vadd.f32 %v1637, %v1679
    %v1681 = vpop.f32.mrf.mxu0
    %v1682 = vadd.f32 %v1639, %v1681
    %v1683 = vpop.f32.mrf.mxu0
    %v1684 = vadd.f32 %v1641, %v1683
    %v1685 = vpop.f32.mrf.mxu0
    %v1686 = vadd.f32 %v1643, %v1685
    %1687 = vdwg.mxu0
    %1688 = vst [vmem:[#allocation2] sm:$0xff] %v1680
    %1689 = vst.msk [vmem:[#allocation2 + $0x8] sm:$0xff] %vm615, %v1682
    %1690 = vst [vmem:[#allocation2 + $0x10] sm:$0xff] %v1684
    %1691 = vst.msk [vmem:[#allocation2 + $0x18] sm:$0xff] %vm615, %v1686
    // Predicated region
    $region22: #{tpu_custom_call.1} parent=1 // pred_check
      _
    $region23: #{tpu_custom_call.1} parent=1 // pred_check_branch
      %1693 = sbr.rel (0) target = $region25
    $region24: #{tpu_custom_call.1} parent=1 // pred_region
      %s1695 = ssub.s32 512, 512
      %1696 = vsyncadd [#allocation3], %s1695
      %s1697 = sshll.u32 [#allocation2], 4
      %s1698 = int_to_ptr.vmem [resolvable:$true] %s1697
      %1703 = dma.vmem_to_hbm [thread:$0]  %s1698, 512, %s5, [#allocation3], 256, 256, 16
    $region25: #{tpu_custom_call.1} parent=1 // pred_fallthru
      _
    // Predicated region
    $region26: #{tpu_custom_call.1} parent=1 // pred_check
      _
    $region27: #{tpu_custom_call.1} parent=1 // pred_check_branch
      %1705 = sbr.rel (0) target = $region29
    $region28: #{tpu_custom_call.1} parent=1 // pred_region
      %1706 = dma.done [#allocation3], 512
    $region29: #{tpu_custom_call.1} parent=1 // pred_fallthru
      _
    %1707 = vsyncpa [#allocation3], 1

</llo_original>
